<compile_context>
chip_gen: v7x
topology: tpu7x:2x2x1
jax: 0.10.0
libtpu: 0.0.40
codegen_flags: <defaults>
</compile_context>

<pallas_src>
import math

import jax
import jax.numpy as jnp
from jax.experimental import pallas as pl
from jax.experimental.pallas import tpu as pltpu


LANE = 128      # TPU lane width — output padded to a multiple of this.
SUBLANE = 8     # TPU sublane width — batch tile rounded to a multiple of this.


def _round_up(n, m):
    return ((n + m - 1) // m) * m


def fused_linear_kernel(x_ref, w_ref, b_ref, o_ref):
    """Single fused GEMM: o = x @ W_comb + b_comb.

    x_ref : (TILE_B, D_in)        streamed per grid step
    w_ref : (D_in, n_out_pad)     VMEM-resident across the grid
    b_ref : (1, n_out_pad)        VMEM-resident across the grid
    o_ref : (TILE_B, n_out_pad)   lane-dense output tile
    """
    acc = jnp.dot(x_ref[...], w_ref[...], preferred_element_type=jnp.float32)
    o_ref[...] = (acc + b_ref[...]).astype(o_ref.dtype)


def fuse_ensemble_params(model_ws, model_bs, w_cls, b_cls, *, lane=LANE):
    """Fold ensemble-of-Linears + classifier Linear into one (padded) Linear.

    model_ws[i]: (d_m, D_in)   PyTorch nn.Linear weight layout
    model_bs[i]: (d_m,)
    w_cls      : (n_out, n_inputs)
    b_cls      : (n_out,)
    Returns (W_comb_pad: (D_in, n_out_pad), b_comb_pad: (1, n_out_pad), n_out).
    """
    w_ens = jnp.concatenate(model_ws, axis=0).T            # (D_in, n_inputs)
    b_ens = jnp.concatenate(model_bs, axis=0)               # (n_inputs,)
    # No nonlinearity between the two Linears -> exact algebraic fold.
    w_comb = w_ens @ w_cls.T                                 # (D_in, n_out)
    b_comb = b_ens @ w_cls.T + b_cls                         # (n_out,)
    n_out = w_comb.shape[1]
    n_out_pad = _round_up(max(n_out, lane), lane)
    w_pad = jnp.zeros((w_comb.shape[0], n_out_pad), w_comb.dtype).at[:, :n_out].set(w_comb)
    b_pad = jnp.zeros((1, n_out_pad), b_comb.dtype).at[0, :n_out].set(b_comb)
    return w_pad, b_pad, n_out


def ensemble_forward(x, w_comb_pad, b_comb_pad, n_out, *, tile_b=128):
    """x: (B, 1, D_in) or (B, D_in). Returns (B, n_out)."""
    x2 = jnp.squeeze(x, axis=1) if x.ndim == 3 else x
    assert x2.ndim == 2, "expected (B, D_in) after squeezing the channel dim"
    B, D_in = x2.shape
    n_out_pad = w_comb_pad.shape[1]

    # Batch tile: as large as requested but no bigger than the (sublane-rounded) batch.
    tb = min(tile_b, _round_up(B, SUBLANE))
    B_pad = _round_up(B, tb)
    if B_pad != B:
        x2 = jnp.pad(x2, ((0, B_pad - B), (0, 0)))
    grid = (B_pad // tb,)

    itemsize = jnp.dtype(x2.dtype).itemsize
    cost = pl.CostEstimate(
        flops=2 * B_pad * D_in * n_out_pad,
        transcendentals=0,
        bytes_accessed=(B_pad * D_in + D_in * n_out_pad + n_out_pad
                        + B_pad * n_out_pad) * itemsize,
    )

    out = pl.pallas_call(
        fused_linear_kernel,
        out_shape=jax.ShapeDtypeStruct((B_pad, n_out_pad), x2.dtype),
        grid_spec=pltpu.PrefetchScalarGridSpec(
            num_scalar_prefetch=0,
            grid=grid,
            in_specs=[
                pl.BlockSpec((tb, D_in), lambda i: (i, 0)),          # x: streamed
                pl.BlockSpec((D_in, n_out_pad), lambda i: (0, 0)),   # W: resident
                pl.BlockSpec((1, n_out_pad), lambda i: (0, 0)),      # b: resident
            ],
            out_specs=pl.BlockSpec((tb, n_out_pad), lambda i: (i, 0)),
        ),
        compiler_params=pltpu.CompilerParams(
            dimension_semantics=("parallel",),      # v7x: shard batch tiles over 2 TCs
            vmem_limit_bytes=64 * 1024 * 1024,      # explicit budget (v5e default is 16 MiB)
        ),
        cost_estimate=cost,
    )(x2, w_comb_pad, b_comb_pad)

    return out[:B, :n_out]


def _torch_linear_init(key, out_f, in_f):
    """Deterministic nn.Linear-style init: U(-1/sqrt(in_f), 1/sqrt(in_f))."""
    kw, kb = jax.random.split(key)
    bound = 1.0 / math.sqrt(in_f)
    w = jax.random.uniform(kw, (out_f, in_f), jnp.float32, -bound, bound)
    b = jax.random.uniform(kb, (out_f,), jnp.float32, -bound, bound)
    return w, b


if __name__ == "__main__":
    # Small shapes consistent with the module:
    #   3 sub-models = nn.Linear(D_in=32, d_m=4)  ->  n_inputs = 12 > len(models) = 3
    #   classifier   = nn.Linear(n_inputs=12, n_outputs=1), layers=1, multi_input=False
    B, D_in, n_models, d_m, n_outputs = 2, 32, 3, 4, 1
    n_inputs = n_models * d_m

    key = jax.random.PRNGKey(0)
    keys = jax.random.split(key, n_models + 2)

    # Per-model Linear(D_in, d_m) params (PyTorch layout).
    model_ws, model_bs = [], []
    for i in range(n_models):
        w, b = _torch_linear_init(keys[i], d_m, D_in)
        model_ws.append(w)
        model_bs.append(b)

    # Classifier Linear(n_inputs, n_outputs).
    w_c, b_c = _torch_linear_init(keys[n_models], n_outputs, n_inputs)

    # Fold ensemble + classifier into a single padded Linear (frozen weights).
    w_comb_pad, b_comb_pad, n_out = fuse_ensemble_params(model_ws, model_bs, w_c, b_c)

    # Input (B, 1, D_in) -> squeeze(axis=1) -> (B, D_in), as in the PyTorch forward.
    x = jax.random.normal(keys[n_models + 1], (B, 1, D_in), jnp.float32)

    out = ensemble_forward(x, w_comb_pad, b_comb_pad, n_out)
    out = jax.block_until_ready(out)

    # Pure-JAX reference of the un-fused PyTorch forward.
    x2 = jnp.squeeze(x, axis=1)
    h_ref = jnp.concatenate([x2 @ w.T + b for w, b in zip(model_ws, model_bs)], axis=-1)
    y_ref = h_ref @ w_c.T + b_c

    assert out.shape == (B, n_outputs)
    assert jnp.allclose(out, y_ref, atol=1e-5, rtol=1e-4), (out, y_ref)

    print("KERNEL_OK")
</pallas_src>

<mosaic_0001>
module attributes {stable_mosaic.version = 11 : i64} {
  func.func @fused_linear_kernel(%arg0: i32, %arg1: memref<8x32xf32, #tpu.memory_space<vmem>>, %arg2: memref<32x128xf32, #tpu.memory_space<vmem>>, %arg3: memref<1x128xf32, #tpu.memory_space<vmem>>, %arg4: memref<8x128xf32, #tpu.memory_space<vmem>>) attributes {dimension_semantics = [#tpu.dimension_semantics<parallel>], iteration_bounds = array<i64: 1>, scalar_prefetch = 0 : i64, scratch_operands = 0 : i64, tpu.core_type = #tpu.core_type<tc>, window_params = [{transform_indices = @transform_0, window_bounds = array<i64: 8, 32>}, {pipeline_mode = #tpu.pipeline_mode<synchronous>, transform_indices = @transform_1, window_bounds = array<i64: 32, 128>}, {pipeline_mode = #tpu.pipeline_mode<synchronous>, transform_indices = @transform_2, window_bounds = array<i64: 1, 128>}, {transform_indices = @transform_3, window_bounds = array<i64: 8, 128>}]} {
    %c0 = arith.constant 0 : index
    %c0_0 = arith.constant 0 : index
    %0 = vector.load %arg1[%c0, %c0_0] : memref<8x32xf32, #tpu.memory_space<vmem>>, vector<8x32xf32>
    %c0_1 = arith.constant 0 : index
    %c0_2 = arith.constant 0 : index
    %1 = vector.load %arg2[%c0_1, %c0_2] : memref<32x128xf32, #tpu.memory_space<vmem>>, vector<32x128xf32>
    %cst = arith.constant dense<0.000000e+00> : vector<8x128xf32>
    %2 = tpu.matmul %0, %1, %cst {dimension_numbers = #tpu.dot_dimension_numbers<[1], [0], [0], [1], [0, 0, 1, 1], [], []>} : vector<8x32xf32>, vector<32x128xf32>, vector<8x128xf32> -> vector<8x128xf32>
    %c0_3 = arith.constant 0 : index
    %c0_4 = arith.constant 0 : index
    %3 = vector.load %arg3[%c0_3, %c0_4] : memref<1x128xf32, #tpu.memory_space<vmem>>, vector<1x128xf32>
    %4 = vector.broadcast %3 : vector<1x128xf32> to vector<8x128xf32>
    %5 = arith.addf %2, %4 : vector<8x128xf32>
    %c0_5 = arith.constant 0 : index
    %c0_6 = arith.constant 0 : index
    %6 = vector.load %arg4[%c0_5, %c0_6] : memref<8x128xf32, #tpu.memory_space<vmem>>, vector<8x128xf32>
    tpu.vector_store %arg4[%c0_5, %c0_6], %5 {strides = array<i32>} : memref<8x128xf32, #tpu.memory_space<vmem>>, vector<8x128xf32>,
    return
  }
  func.func @transform_0(%arg0: i32) -> (i32, i32) {
    %c0_i32 = arith.constant 0 : i32
    %c0_i32_0 = arith.constant 0 : i32
    return %arg0, %c0_i32 : i32, i32
  }
  func.func @transform_1(%arg0: i32) -> (i32, i32) {
    %c0_i32 = arith.constant 0 : i32
    %c0_i32_0 = arith.constant 0 : i32
    %c0_i32_1 = arith.constant 0 : i32
    return %c0_i32, %c0_i32_0 : i32, i32
  }
  func.func @transform_2(%arg0: i32) -> (i32, i32) {
    %c0_i32 = arith.constant 0 : i32
    %c0_i32_0 = arith.constant 0 : i32
    %c0_i32_1 = arith.constant 0 : i32
    return %c0_i32, %c0_i32_0 : i32, i32
  }
  func.func @transform_3(%arg0: i32) -> (i32, i32) {
    %c0_i32 = arith.constant 0 : i32
    %c0_i32_0 = arith.constant 0 : i32
    return %arg0, %c0_i32 : i32, i32
  }
}

</mosaic_0001>

<llo_original>
// kernel: tpu_custom_call.1
$region0: #{tpu_custom_call.1}
  #allocation0 [shape = 'u32[]', space=smem, size = 0x4, offset = 0x4, fixed_abs, tag = 'smem constant byte address 0x4 - core index']
  #allocation1 [shape = 'u32[144,128]{1,0:T(1,128)}', space=vmem, size = 0x12000, scoped, tag = 'internal scratch']
  %s0 = inlined_call_operand.hbm [shape: f32[8,32], index: 0, kind: input, shape index: {}]
  %s1 = inlined_call_operand.hbm [shape: f32[32,128], index: 1, kind: input, shape index: {}]
  %s2 = inlined_call_operand.hbm [shape: f32[1,128], index: 2, kind: input, shape index: {}]
  %s3 = inlined_call_operand.hbm [shape: f32[8,128], index: 3, kind: output, shape index: {}]
  %s4 = sld [smem:[#allocation0]]
  $region34: #{tpu_custom_call.1} parent=0
    _
  %s6 = ssub.s32 1, %s4
  %s7 = scalar_select 0, %s6, %s4
  $region1: #{tpu_custom_call.1} parent=0
    #allocation2 [shape = 'u8[4096]{0}', space=vmem, size = 0x1000, scoped, tag = 'input window, operand 0, single buffered']
    #allocation3 [shape = 's32[1]{0}', space=sflag, size = 0x4, scoped, tag = 'scoped memory for tpu_custom_call.1']
    #allocation4 [shape = 's32[1]{0}', space=sflag, size = 0x4, scoped, tag = 'scoped memory for tpu_custom_call.1']
    #allocation5 [shape = 'u8[16384]{0}', space=vmem, size = 0x4000, scoped, tag = 'input window, operand 1, single buffered']
    #allocation6 [shape = 's32[1]{0}', space=sflag, size = 0x4, scoped, tag = 'scoped memory for tpu_custom_call.1']
    #allocation7 [shape = 'u8[512]{0}', space=vmem, size = 0x400, scoped, tag = 'input window, operand 2, single buffered']
    #allocation8 [shape = 'u8[4096]{0}', space=vmem, size = 0x1000, scoped, tag = 'output window, operand 0, single buffered']
    %8 = vsyncpa [#allocation3], 0
    %9 = vsyncpa [#allocation6], 0
    %10 = vsyncpa [#allocation4], 0
    // Predicated region
    $region2: #{tpu_custom_call.1} parent=1 // pred_check
      _
    $region3: #{tpu_custom_call.1} parent=1 // pred_check_branch
      %12 = sbr.rel (0) target = $region5
    $region4: #{tpu_custom_call.1} parent=1 // pred_region
      %s14 = ssub.s32 128, 128
      %15 = vsyncadd [#allocation3], %s14
      %s17 = sshll.u32 [#allocation2], 4
      %s18 = int_to_ptr.vmem [resolvable:$true] %s17
      %20 = dma.hbm_to_vmem [thread:$0]  %s0, 128, %s18, [#allocation3]
    $region5: #{tpu_custom_call.1} parent=1 // pred_fallthru
      _
    // Predicated region
    $region6: #{tpu_custom_call.1} parent=1 // pred_check
      _
    $region7: #{tpu_custom_call.1} parent=1 // pred_check_branch
      %22 = sbr.rel (0) target = $region9
    $region8: #{tpu_custom_call.1} parent=1 // pred_region
      %s24 = ssub.s32 512, 512
      %25 = vsyncadd [#allocation6], %s24
      %s26 = sshll.u32 [#allocation5], 4
      %s27 = int_to_ptr.vmem [resolvable:$true] %s26
      %32 = dma.hbm_to_vmem [thread:$0]  %s1, 512, %s27, [#allocation6], 128, 128, 8
    $region9: #{tpu_custom_call.1} parent=1 // pred_fallthru
      _
    // Predicated region
    $region10: #{tpu_custom_call.1} parent=1 // pred_check
      _
    $region11: #{tpu_custom_call.1} parent=1 // pred_check_branch
      %34 = sbr.rel (0) target = $region13
    $region12: #{tpu_custom_call.1} parent=1 // pred_region
      %s36 = ssub.s32 16, 16
      %37 = vsyncadd [#allocation6], %s36
      %s39 = sshll.u32 [#allocation7], 4
      %s40 = int_to_ptr.vmem [resolvable:$true] %s39
      %42 = dma.hbm_to_vmem [thread:$0]  %s2, 16, %s40, [#allocation6]
    $region13: #{tpu_custom_call.1} parent=1 // pred_fallthru
      _
    // Predicated region
    $region14: #{tpu_custom_call.1} parent=1 // pred_check
      _
    $region15: #{tpu_custom_call.1} parent=1 // pred_check_branch
      %44 = sbr.rel (0) target = $region17
    $region16: #{tpu_custom_call.1} parent=1 // pred_region
      %45 = dma.done [#allocation3], 128
    $region17: #{tpu_custom_call.1} parent=1 // pred_fallthru
      _
    // Predicated region
    $region18: #{tpu_custom_call.1} parent=1 // pred_check
      _
    $region19: #{tpu_custom_call.1} parent=1 // pred_check_branch
      %47 = sbr.rel (0) target = $region21
    $region20: #{tpu_custom_call.1} parent=1 // pred_region
      %48 = dma.done [#allocation6], 512
    $region21: #{tpu_custom_call.1} parent=1 // pred_fallthru
      _
    // Predicated region
    $region22: #{tpu_custom_call.1} parent=1 // pred_check
      _
    $region23: #{tpu_custom_call.1} parent=1 // pred_check_branch
      %50 = sbr.rel (0) target = $region25
    $region24: #{tpu_custom_call.1} parent=1 // pred_region
      %51 = dma.done [#allocation6], 16
    $region25: #{tpu_custom_call.1} parent=1 // pred_fallthru
      _
    %v52 = vld [vmem:[#allocation2] sm:$0xff]
    %v53 = vld [vmem:[#allocation5] sm:$0xff]
    %v54 = vld [vmem:[#allocation5 + $0x8] sm:$0xff]
    %v55 = vld [vmem:[#allocation5 + $0x10] sm:$0xff]
    %v56 = vld [vmem:[#allocation5 + $0x18] sm:$0xff]
    %v57 = vld [vmem:[#allocation7] sm:$0x1]
    %v59 = vlaneseq
    %v60 = vshrl.u32 %v59, 7
    %v61 = vsub.s32 0, %v60
    %v62 = vrot.slane %v57, %v61
    %vm64 = vcmask 261120
    %v66 = vsel %vm64, %v52, 0
    %68 = vmatprep.subr.mxu0 0.0
    %69 = vmatpush1.msra.mxu0 %v53
    %70 = vmatprep.subr.mxu0 0.0
    %71 = vmatpush1.msra.mxu0 %v54
    %72 = vmatprep.subr.mxu0 0.0
    %73 = vmatpush1.msra.mxu0 %v55
    %74 = vmatprep.subr.mxu0 0.0
    %75 = vmatpush1.msra.mxu0 %v56
    %76 = vmatprep.subr.mxu0 0.0
    %77 = vmatpush1.msra.mxu0 0.0
    %78 = vmatprep.subr.mxu0 0.0
    %79 = vmatpush1.msra.mxu0 0.0
    %80 = vmatprep.subr.mxu0 0.0
    %81 = vmatpush1.msra.mxu0 0.0
    %82 = vmatprep.subr.mxu0 0.0
    %83 = vmatpush1.msra.mxu0 0.0
    %84 = vmatprep.subr.mxu0 0.0
    %85 = vmatpush1.msra.mxu0 0.0
    %86 = vmatprep.subr.mxu0 0.0
    %87 = vmatpush1.msra.mxu0 0.0
    %88 = vmatprep.subr.mxu0 0.0
    %89 = vmatpush1.msra.mxu0 0.0
    %90 = vmatprep.subr.mxu0 0.0
    %91 = vmatpush1.msra.mxu0 0.0
    %92 = vmatprep.subr.mxu0 0.0
    %93 = vmatpush1.msra.mxu0 0.0
    %94 = vmatprep.subr.mxu0 0.0
    %95 = vmatpush1.msra.mxu0 0.0
    %96 = vmatprep.subr.mxu0 0.0
    %97 = vmatpush1.msra.mxu0 0.0
    %98 = vmatprep.subr.mxu0 0.0
    %99 = vmatpush1.msra.mxu0 0.0
    %100 = vmatprep.subr.mxu0 0.0
    %101 = vmatpush1.msra.mxu0 0.0
    %102 = vmatprep.subr.mxu0 0.0
    %103 = vmatpush1.msra.mxu0 0.0
    %104 = vmatprep.subr.mxu0 0.0
    %105 = vmatpush1.msra.mxu0 0.0
    %106 = vmatprep.subr.mxu0 0.0
    %107 = vmatpush1.msra.mxu0 0.0
    %108 = vmatprep.subr.mxu0 0.0
    %109 = vmatpush1.msra.mxu0 0.0
    %110 = vmatprep.subr.mxu0 0.0
    %111 = vmatpush1.msra.mxu0 0.0
    %112 = vmatprep.subr.mxu0 0.0
    %113 = vmatpush1.msra.mxu0 0.0
    %114 = vmatprep.subr.mxu0 0.0
    %115 = vmatpush1.msra.mxu0 0.0
    %116 = vmatprep.subr.mxu0 0.0
    %117 = vmatpush1.msra.mxu0 0.0
    %118 = vmatprep.subr.mxu0 0.0
    %119 = vmatpush1.msra.mxu0 0.0
    %120 = vmatprep.subr.mxu0 0.0
    %121 = vmatpush1.msra.mxu0 0.0
    %122 = vmatprep.subr.mxu0 0.0
    %123 = vmatpush1.msra.mxu0 0.0
    %124 = vmatprep.subr.mxu0 0.0
    %125 = vmatpush1.msra.mxu0 0.0
    %126 = vmatprep.subr.mxu0 0.0
    %127 = vmatpush1.msra.mxu0 0.0
    %128 = vmatprep.subr.mxu0 0.0
    %129 = vmatpush1.msra.mxu0 0.0
    %130 = vmatprep.subr.mxu0 0.0
    %131 = vmatpush1.msra.mxu0 0.0
    %132 = vmatprep.mubr.f32.mxu0 0.0
    %133 = vmatmul.mubr.f32.gmra.mrb[0].mxu0 %v66
    %v134 = vpop.f32.mrb[0].mxu0
    %v135 = vadd.f32 %v62, %v134
    %v136 = vpop.f32.mrb[0].mxu0
    %137 = vdwg.mxu0
    %138 = vst [vmem:[#allocation8] sm:$0xff] %v135
    // Predicated region
    $region26: #{tpu_custom_call.1} parent=1 // pred_check
      _
    $region27: #{tpu_custom_call.1} parent=1 // pred_check_branch
      %140 = sbr.rel (0) target = $region29
    $region28: #{tpu_custom_call.1} parent=1 // pred_region
      %s142 = ssub.s32 128, 128
      %143 = vsyncadd [#allocation4], %s142
      %s145 = sshll.u32 [#allocation8], 4
      %s146 = int_to_ptr.vmem [resolvable:$true] %s145
      %148 = dma.vmem_to_hbm [thread:$0]  %s146, 128, %s3, [#allocation4]
    $region29: #{tpu_custom_call.1} parent=1 // pred_fallthru
      _
    // Predicated region
    $region30: #{tpu_custom_call.1} parent=1 // pred_check
      _
    $region31: #{tpu_custom_call.1} parent=1 // pred_check_branch
      %150 = sbr.rel (0) target = $region33
    $region32: #{tpu_custom_call.1} parent=1 // pred_region
      %151 = dma.done [#allocation4], 128
    $region33: #{tpu_custom_call.1} parent=1 // pred_fallthru
      _
    %152 = vsyncpa [#allocation3], 1
    %153 = vsyncpa [#allocation6], 1
    %154 = vsyncpa [#allocation4], 1

</llo_original>
